<compile_context>
chip_gen: v5e
topology: v5e:2x2
jax: 0.10.0
libtpu: 0.0.40
codegen_flags: <defaults>
</compile_context>

<pallas_src>
import functools
import math

import jax
import jax.numpy as jnp
from jax.experimental import pallas as pl
from jax.experimental.pallas import tpu as pltpu

_LANE = 128
_SUBLANE = 8
_TARGET_BLOCK_BYTES = 4 << 20       # ~4 MiB per x/out block
_MIN_PALLAS_BYTES = 1 << 20         # below this, plain-XLA fast path


def build_pe_table(emb_dim: int, max_seq_len: int) -> jnp.ndarray:
    """Vectorized construction reproducing the PyTorch double loop exactly
    (including the 2*(i+1)/emb_dim exponent on the cos term)."""
    assert emb_dim % 2 == 0, "PositionalEncoder requires an even emb_dim (as in the PyTorch source)"
    pos = jnp.arange(max_seq_len, dtype=jnp.float32)[:, None]          # (L, 1)
    i = jnp.arange(0, emb_dim, 2, dtype=jnp.float32)[None, :]          # (1, D/2): even indices
    sin_vals = jnp.sin(pos / 10000.0 ** (2.0 * i / emb_dim))           # even slots
    cos_vals = jnp.cos(pos / 10000.0 ** (2.0 * (i + 1.0) / emb_dim))   # odd slots
    pe = jnp.stack([sin_vals, cos_vals], axis=-1).reshape(max_seq_len, emb_dim)
    return pe.astype(jnp.float32)


def _round_up(x: int, m: int) -> int:
    return ((x + m - 1) // m) * m


def prepare_pe(pe_full: jnp.ndarray, seq_len: int, dtype) -> jnp.ndarray:
    """Hoistable per-(seq_len, dtype) prep: slice, cast, flatten, lane-pad the pe table.
    Do this once at model init / per decode length, not on every forward call."""
    emb_dim = pe_full.shape[1]
    F = seq_len * emb_dim
    F_pad = _round_up(F, _LANE)
    pe_row = pe_full[:seq_len, :].astype(dtype).reshape(1, F)
    if F_pad != F:
        pe_row = jnp.pad(pe_row, ((0, 0), (0, F_pad - F)))
    return pe_row


def _pos_enc_kernel(x_ref, pe_ref, o_ref, *, scale):
    # x_ref / o_ref: (tB, tF) lane-dense block of the flattened (B, F_pad) input.
    # pe_ref: (1, tF) slice of the flattened pe row; broadcasts over the sublane axis.
    o_ref[...] = x_ref[...] * scale + pe_ref[...]


def positional_encoder_pallas(x: jnp.ndarray, pe_row: jnp.ndarray) -> jnp.ndarray:
    """x: (B, S, D); pe_row: (1, F_pad) from prepare_pe. Returns x*sqrt(D) + pe[:S]."""
    B, S, D = x.shape
    scale = math.sqrt(D)
    F = S * D
    F_pad = pe_row.shape[1]
    itemsize = jnp.dtype(x.dtype).itemsize

    x2 = x.reshape(B, F)
    if F_pad != F:
        x2 = jnp.pad(x2, ((0, 0), (0, F_pad - F)))

    # --- tile sizing: aim for ~_TARGET_BLOCK_BYTES per x/out block ---------------------
    tB = B if B <= _SUBLANE else _SUBLANE
    tF = (_TARGET_BLOCK_BYTES // (tB * itemsize)) // _LANE * _LANE
    tF = min(F_pad, max(_LANE, tF))
    if tF == F_pad and B > tB:
        # Flat axis saturated: grow the sublane tile (multiples of 8) to restore the target.
        want_tB = max(_SUBLANE, (_TARGET_BLOCK_BYTES // (F_pad * itemsize)) // _SUBLANE * _SUBLANE)
        tB = B if want_tB >= B else want_tB

    nF = pl.cdiv(F_pad, tF)
    nB = pl.cdiv(B, tB)
    if nF * nB == 1 and F_pad >= 2 * _LANE:
        # Keep >=2 "parallel" grid steps so v7x's second TensorCore has work.
        tF = pl.cdiv(F_pad // _LANE, 2) * _LANE
        nF = pl.cdiv(F_pad, tF)

    # VMEM limit derived from the actual tiling: x/out double-buffered + pe row + headroom.
    block_bytes = tB * tF * itemsize
    need = 2 * 2 * block_bytes + 2 * tF * itemsize
    vmem_limit = min(max(need + need // 4 + (1 << 20), 16 << 20), 48 << 20)

    kernel = functools.partial(_pos_enc_kernel, scale=scale)

    out2 = pl.pallas_call(
        kernel,
        out_shape=jax.ShapeDtypeStruct((B, F_pad), x.dtype),
        grid_spec=pltpu.PrefetchScalarGridSpec(
            num_scalar_prefetch=0,
            grid=(nF, nB),  # flat tiles outer, batch tiles inner -> pe row stays resident
            in_specs=[
                pl.BlockSpec((tB, tF), lambda f, b: (b, f)),   # x block
                pl.BlockSpec((1, tF), lambda f, b: (0, f)),    # pe block (reused across batch)
            ],
            out_specs=pl.BlockSpec((tB, tF), lambda f, b: (b, f)),
        ),
        compiler_params=pltpu.CompilerParams(
            dimension_semantics=("parallel", "parallel"),
            vmem_limit_bytes=int(vmem_limit),
        ),
    )(x2, pe_row)

    if F_pad != F:
        out2 = out2[:, :F]
    return out2.reshape(B, S, D)


def positional_encoder(x: jnp.ndarray, pe_full: jnp.ndarray) -> jnp.ndarray:
    """Public entry: x (B, S, D), pe_full (max_seq_len, D). Eval-mode dropout == identity."""
    B, S, D = x.shape
    if x.size * jnp.dtype(x.dtype).itemsize < _MIN_PALLAS_BYTES:
        # Tiny-input fast path: XLA fusion beats pallas_call fixed dispatch/DMA cost.
        return x * math.sqrt(D) + pe_full[None, :S, :].astype(x.dtype)
    return positional_encoder_pallas(x, prepare_pe(pe_full, S, x.dtype))


if __name__ == "__main__":
    emb_dim = 32
    max_seq_len = 80
    batch = 2
    seq_len = 8

    key = jax.random.PRNGKey(0)
    x = jax.random.normal(key, (batch, seq_len, emb_dim), dtype=jnp.float32)
    pe_full = build_pe_table(emb_dim, max_seq_len)

    # Force the Pallas path on the small test shape (the public wrapper would take the
    # XLA fast path for inputs this tiny); pe prep hoisted as in real use.
    pe_row = prepare_pe(pe_full, seq_len, x.dtype)
    out = jax.block_until_ready(positional_encoder_pallas(x, pe_row))

    ref = x * math.sqrt(emb_dim) + pe_full[None, :seq_len, :]
    assert out.shape == (batch, seq_len, emb_dim)
    assert jnp.allclose(out, ref, atol=1e-5, rtol=1e-5)

    # Padding path: S*D not a multiple of 128 (exercises lane-padding + slice-back).
    emb_dim2, seq_len2 = 24, 7
    x_b = jax.random.normal(jax.random.PRNGKey(1), (batch, seq_len2, emb_dim2), dtype=jnp.float32)
    pe_full2 = build_pe_table(emb_dim2, max_seq_len)
    out_b = jax.block_until_ready(
        positional_encoder_pallas(x_b, prepare_pe(pe_full2, seq_len2, x_b.dtype)))
    ref_b = x_b * math.sqrt(emb_dim2) + pe_full2[None, :seq_len2, :]
    assert out_b.shape == (batch, seq_len2, emb_dim2)
    assert jnp.allclose(out_b, ref_b, atol=1e-5, rtol=1e-5)

    # Public wrapper (tiny input -> XLA fast path) matches too.
    out_c = jax.block_until_ready(positional_encoder(x, pe_full))
    assert jnp.allclose(out_c, ref, atol=1e-5, rtol=1e-5)

    print("KERNEL_OK")
</pallas_src>

<mosaic_0001>
module attributes {stable_mosaic.version = 11 : i64} {
  func.func @_pos_enc_kernel(%arg0: i32, %arg1: i32, %arg2: memref<2x128xf32, #tpu.memory_space<vmem>>, %arg3: memref<1x128xf32, #tpu.memory_space<vmem>>, %arg4: memref<2x128xf32, #tpu.memory_space<vmem>>) attributes {dimension_semantics = [#tpu.dimension_semantics<parallel>, #tpu.dimension_semantics<parallel>], iteration_bounds = array<i64: 2, 1>, scalar_prefetch = 0 : i64, scratch_operands = 0 : i64, tpu.core_type = #tpu.core_type<tc>, window_params = [{transform_indices = @transform_0, window_bounds = array<i64: 2, 128>}, {transform_indices = @transform_1, window_bounds = array<i64: 1, 128>}, {transform_indices = @transform_2, window_bounds = array<i64: 2, 128>}]} {
    %c0 = arith.constant 0 : index
    %c0_0 = arith.constant 0 : index
    %0 = vector.load %arg2[%c0, %c0_0] : memref<2x128xf32, #tpu.memory_space<vmem>>, vector<2x128xf32>
    %cst = arith.constant 5.65685415 : f32
    %1 = vector.broadcast %cst : f32 to vector<2x128xf32>
    %2 = arith.mulf %0, %1 : vector<2x128xf32>
    %c0_1 = arith.constant 0 : index
    %c0_2 = arith.constant 0 : index
    %3 = vector.load %arg3[%c0_1, %c0_2] : memref<1x128xf32, #tpu.memory_space<vmem>>, vector<1x128xf32>
    %4 = vector.broadcast %3 : vector<1x128xf32> to vector<2x128xf32>
    %5 = arith.addf %2, %4 : vector<2x128xf32>
    %c0_3 = arith.constant 0 : index
    %c0_4 = arith.constant 0 : index
    %6 = vector.load %arg4[%c0_3, %c0_4] : memref<2x128xf32, #tpu.memory_space<vmem>>, vector<2x128xf32>
    tpu.vector_store %arg4[%c0_3, %c0_4], %5 {strides = array<i32>} : memref<2x128xf32, #tpu.memory_space<vmem>>, vector<2x128xf32>,
    return
  }
  func.func @transform_0(%arg0: i32, %arg1: i32) -> (i32, i32) {
    %c0_i32 = arith.constant 0 : i32
    return %arg1, %arg0 : i32, i32
  }
  func.func @transform_1(%arg0: i32, %arg1: i32) -> (i32, i32) {
    %c0_i32 = arith.constant 0 : i32
    %c0_i32_0 = arith.constant 0 : i32
    return %c0_i32, %arg0 : i32, i32
  }
  func.func @transform_2(%arg0: i32, %arg1: i32) -> (i32, i32) {
    %c0_i32 = arith.constant 0 : i32
    return %arg1, %arg0 : i32, i32
  }
}

</mosaic_0001>

<llo_original>
// kernel: tpu_custom_call.1
$region0: #{tpu_custom_call.1}
  #allocation0 [shape = 'u32[]', space=smem, size = 0x4, offset = 0x4, fixed_abs, tag = 'smem constant byte address 0x4 - core index']
  #allocation1 [shape = 'u32[72,128]{1,0:T(1,128)}', space=vmem, size = 0x9000, scoped, tag = 'internal scratch']
  %s0 = inlined_call_operand.hbm [shape: f32[2,256], index: 0, kind: input, shape index: {}]
  %s1 = inlined_call_operand.hbm [shape: f32[1,256], index: 1, kind: input, shape index: {}]
  %s2 = inlined_call_operand.hbm [shape: f32[2,256], index: 2, kind: output, shape index: {}]
  %s3 = sld [smem:[#allocation0]]
  $region49: #{tpu_custom_call.1} parent=0
    _
  %s5 = ssub.s32 1, %s3
  %s6 = scalar_select 0, %s5, %s3
  $region1: #{tpu_custom_call.1} parent=0
    #allocation2 [shape = 'u8[2048]{0}', space=vmem, size = 0x800, scoped, tag = 'input window, operand 0']
    #allocation3 [shape = 's32[2]{0}', space=sflag, size = 0x8, scoped, tag = 'scoped memory for tpu_custom_call.1']
    #allocation4 [shape = 's32[2]{0}', space=sflag, size = 0x8, scoped, tag = 'scoped memory for tpu_custom_call.1']
    #allocation5 [shape = 'u8[1024]{0}', space=vmem, size = 0x400, scoped, tag = 'input window, operand 1']
    #allocation6 [shape = 's32[2]{0}', space=sflag, size = 0x8, scoped, tag = 'scoped memory for tpu_custom_call.1']
    #allocation7 [shape = 'u8[2048]{0}', space=vmem, size = 0x800, scoped, tag = 'output window, operand 0']
    %7 = vsyncpa [#allocation3], 0
    %s8 = scalar_lea.sflag [#allocation3], 1
    %9 = vsyncpa %s8, 0
    %10 = vsyncpa [#allocation6], 0
    %s11 = scalar_lea.sflag [#allocation6], 1
    %12 = vsyncpa %s11, 0
    %13 = vsyncpa [#allocation4], 0
    %s14 = scalar_lea.sflag [#allocation4], 1
    %15 = vsyncpa %s14, 0
    loop: start=0, step=1, limit=4
    $region2: #{tpu_custom_call.1} parent=1 // loop_pre_header
      _
    $region3: #{tpu_custom_call.1} parent=1 // loop_header
      %s17 = sphi 0, %s21
      %p18 = scmp.ge.s32.totalorder %s17, 4
      %s24 = sphi 0, %s36
      %s25 = sphi 0, %s32
      %s26 = sphi 0, %s24
      %s27 = sphi 0, %s25
      %s28 = sphi 0, %s26
      %s29 = sphi 0, %s27
      %s41 = sphi 0, %s43
      %s44 = sphi 0, %s41
      %s45 = sphi 0, %s44
      %s61 = sphi 0, %s45
      %s67 = sphi 0, %s69
      %s70 = sphi 0, %s67
      %s71 = sphi 0, %s70
      %s87 = sphi 0, %s71
      %s95 = sphi 0, %s97
      %s98 = sphi 0, %s95
      %s99 = sphi 0, %s98
      %s115 = sphi 0, %s99
    $region4: #{tpu_custom_call.1} parent=1 // loop_header_branch
      %20 = sbr.rel (%p18) target = $region8
    $region5: #{tpu_custom_call.1} parent=1 // loop_body
      %s22 = ssub.s32 %s17, 1
      %s23 = ssub.s32 %s17, 2
      %s30 = sadd.s32 1, %s25
      %p31 = scmp.ge.s32.totalorder %s30, 1
      %s32 = scalar_select %p31, 0, %s30
      %s33 = sadd.s32 1, %s24
      %s34 = scalar_select %p31, %s33, %s24
      %p35 = scmp.ge.s32.totalorder %s34, 2
      %s36 = scalar_select %p35, 0, %s34
      %s37 = ssub.s32 %s25, %s32
      %s38 = ssub.s32 %s24, %s36
      %s39 = sor.u32 %s37, %s38
      %p40 = scmp.eq.s32.totalorder %s39, 0
      %s42 = sadd.s32 %s41, 1
      %s43 = scalar_select %p40, %s41, %s42
      %p46 = pneg %p40
      %p47 = scmp.eq.s32.totalorder %s17, 1
      %p48 = por %p46, %p47
      %p49 = scmp.ne.s32.totalorder %s41, %s44
      %p50 = scmp.eq.s32.totalorder %s17, 0
      %p51 = por %p49, %p50
      %p52 = scmp.ne.s32.totalorder %s41, %s44
      %p53 = scmp.eq.s32.totalorder %s22, 1
      %p54 = por %p52, %p53
      %p55 = scmp.ne.s32.totalorder %s44, %s45
      %p56 = scmp.eq.s32.totalorder %s22, 0
      %p57 = por %p55, %p56
      %p58 = scmp.ne.s32.totalorder %s44, %s45
      %p59 = scmp.eq.s32.totalorder %s23, 1
      %p60 = por %p58, %p59
      %p62 = scmp.ne.s32.totalorder %s45, %s61
      %p63 = scmp.eq.s32.totalorder %s23, 0
      %p64 = por %p62, %p63
      %s65 = ssub.s32 %s24, %s36
      %p66 = scmp.eq.s32.totalorder %s65, 0
      %s68 = sadd.s32 %s67, 1
      %s69 = scalar_select %p66, %s67, %s68
      %p72 = pneg %p66
      %p73 = scmp.eq.s32.totalorder %s17, 1
      %p74 = por %p72, %p73
      %p75 = scmp.ne.s32.totalorder %s67, %s70
      %p76 = scmp.eq.s32.totalorder %s17, 0
      %p77 = por %p75, %p76
      %p78 = scmp.ne.s32.totalorder %s67, %s70
      %p79 = scmp.eq.s32.totalorder %s22, 1
      %p80 = por %p78, %p79
      %p81 = scmp.ne.s32.totalorder %s70, %s71
      %p82 = scmp.eq.s32.totalorder %s22, 0
      %p83 = por %p81, %p82
      %p84 = scmp.ne.s32.totalorder %s70, %s71
      %p85 = scmp.eq.s32.totalorder %s23, 1
      %p86 = por %p84, %p85
      %p88 = scmp.ne.s32.totalorder %s71, %s87
      %p89 = scmp.eq.s32.totalorder %s23, 0
      %p90 = por %p88, %p89
      %s91 = ssub.s32 %s25, %s32
      %s92 = ssub.s32 %s24, %s36
      %s93 = sor.u32 %s91, %s92
      %p94 = scmp.eq.s32.totalorder %s93, 0
      %s96 = sadd.s32 %s95, 1
      %s97 = scalar_select %p94, %s95, %s96
      %p100 = pneg %p94
      %p101 = scmp.eq.s32.totalorder %s17, 1
      %p102 = por %p100, %p101
      %p103 = scmp.ne.s32.totalorder %s95, %s98
      %p104 = scmp.eq.s32.totalorder %s17, 0
      %p105 = por %p103, %p104
      %p106 = scmp.ne.s32.totalorder %s95, %s98
      %p107 = scmp.eq.s32.totalorder %s22, 1
      %p108 = por %p106, %p107
      %p109 = scmp.ne.s32.totalorder %s98, %s99
      %p110 = scmp.eq.s32.totalorder %s22, 0
      %p111 = por %p109, %p110
      %p112 = scmp.ne.s32.totalorder %s98, %s99
      %p113 = scmp.eq.s32.totalorder %s23, 1
      %p114 = por %p112, %p113
      %p116 = scmp.ne.s32.totalorder %s99, %s115
      %p117 = scmp.eq.s32.totalorder %s23, 0
      %p118 = por %p116, %p117
      %p119 = scmp.le.s32.totalorder 1, %s17
      %p120 = scmp.lt.s32.totalorder %s17, 3
      %p121 = pnand %p119, %p120
      %p122 = pneg %p121
      // Predicated region
      $region9: #{tpu_custom_call.1} parent=5 // pred_check
        _
      $region10: #{tpu_custom_call.1} parent=5 // pred_check_branch
        %124 = sbr.rel (%p121) target = $region12
      $region11: #{tpu_custom_call.1} parent=5 // pred_region
        %s125 = ssub.s32 %s17, 1
      $region12: #{tpu_custom_call.1} parent=5 // pred_fallthru
        _
      %p126 = scmp.lt.s32.totalorder %s17, 2
      // Predicated region
      $region13: #{tpu_custom_call.1} parent=5 // pred_check
        %p127 = pneg %p126
      $region14: #{tpu_custom_call.1} parent=5 // pred_check_branch
        %129 = sbr.rel (%p127) target = $region16
      $region15: #{tpu_custom_call.1} parent=5 // pred_region
        // Predicated region
        $region17: #{tpu_custom_call.1} parent=15 // pred_check
          %p130 = pneg %p51
        $region18: #{tpu_custom_call.1} parent=15 // pred_check_branch
          %132 = sbr.rel (%p130) target = $region20
        $region19: #{tpu_custom_call.1} parent=15 // pred_region
          %s133 = sand.u32 %s41, 1
          %s134 = scalar_lea.sflag [#allocation3], %s133
          %s135 = sand.u32 %s41, 1
          %s136 = smul.addr %s135, 2
          %s137 = scalar_lea.vmem [#allocation2], %s136
          %139 = vsyncadd %s134, 0
          %s140 = smul.addr %s25, 2
          %s141 = sadd.s32 %s24, %s140
          %s142 = smul.addr %s141, 2
          %s143 = scalar_lea.hbm %s0, %s142
          %s145 = sshll.u32 %s143, 4
          %s146 = int_to_ptr.hbm [resolvable:$true] %s145
          %s147 = sshll.u32 %s137, 4
          %s148 = int_to_ptr.vmem [resolvable:$true] %s147
          %150 = dma.hbm_to_vmem [thread:$0]  %s146, 32, %s148, %s134
        $region20: #{tpu_custom_call.1} parent=15 // pred_fallthru
          _
        // Predicated region
        $region21: #{tpu_custom_call.1} parent=15 // pred_check
          %p151 = pneg %p77
        $region22: #{tpu_custom_call.1} parent=15 // pred_check_branch
          %153 = sbr.rel (%p151) target = $region24
        $region23: #{tpu_custom_call.1} parent=15 // pred_region
          %s154 = sand.u32 %s67, 1
          %s155 = scalar_lea.sflag [#allocation6], %s154
          %s156 = sand.u32 %s67, 1
          %s157 = scalar_lea.vmem [#allocation5], %s156
          %159 = vsyncadd %s155, 0
          %s160 = scalar_lea.hbm %s1, %s24
          %s162 = sshll.u32 %s160, 4
          %s163 = int_to_ptr.hbm [resolvable:$true] %s162
          %s164 = sshll.u32 %s157, 4
          %s165 = int_to_ptr.vmem [resolvable:$true] %s164
          %167 = dma.hbm_to_vmem [thread:$0]  %s163, 16, %s165, %s155
        $region24: #{tpu_custom_call.1} parent=15 // pred_fallthru
          _
      $region16: #{tpu_custom_call.1} parent=5 // pred_fallthru
        _
      %p168 = scmp.le.s32.totalorder 1, %s17
      %p169 = scmp.lt.s32.totalorder %s17, 3
      %p170 = pnand %p168, %p169
      %p171 = pneg %p170
      // Predicated region
      $region25: #{tpu_custom_call.1} parent=5 // pred_check
        _
      $region26: #{tpu_custom_call.1} parent=5 // pred_check_branch
        %173 = sbr.rel (%p170) target = $region28
      $region27: #{tpu_custom_call.1} parent=5 // pred_region
        %s174 = ssub.s32 %s17, 1
        %s175 = sand.u32 %s44, 1
        %s176 = scalar_lea.sflag [#allocation3], %s175
        %s177 = sand.u32 %s44, 1
        %s178 = smul.addr %s177, 2
        %s179 = scalar_lea.vmem [#allocation2], %s178
        // Predicated region
        $region29: #{tpu_custom_call.1} parent=27 // pred_check
          %p180 = pneg %p57
        $region30: #{tpu_custom_call.1} parent=27 // pred_check_branch
          %182 = sbr.rel (%p180) target = $region32
        $region31: #{tpu_custom_call.1} parent=27 // pred_region
          %184 = dma.done %s176, 32
        $region32: #{tpu_custom_call.1} parent=27 // pred_fallthru
          _
        %s185 = sand.u32 %s70, 1
        %s186 = scalar_lea.sflag [#allocation6], %s185
        %s187 = sand.u32 %s70, 1
        %s188 = scalar_lea.vmem [#allocation5], %s187
        // Predicated region
        $region33: #{tpu_custom_call.1} parent=27 // pred_check
          %p189 = pneg %p83
        $region34: #{tpu_custom_call.1} parent=27 // pred_check_branch
          %191 = sbr.rel (%p189) target = $region36
        $region35: #{tpu_custom_call.1} parent=27 // pred_region
          %193 = dma.done %s186, 16
        $region36: #{tpu_custom_call.1} parent=27 // pred_fallthru
          _
        %s194 = sand.u32 %s44, 1
        %s195 = scalar_lea.sflag [#allocation3], %s194
        %s196 = sand.u32 %s44, 1
        %s197 = smul.addr %s196, 2
        %s198 = scalar_lea.vmem [#allocation2], %s197
        %p199 = pneg %p57
        %p200 = pneg %p54
        %s201 = sand.u32 %s70, 1
        %s202 = scalar_lea.sflag [#allocation6], %s201
        %s203 = sand.u32 %s70, 1
        %s204 = scalar_lea.vmem [#allocation5], %s203
        %p205 = pneg %p83
        %p206 = pneg %p80
        %p207 = pneg %p111
        %p208 = pneg %p108
        %s209 = sand.u32 %s98, 1
        %s210 = scalar_lea.sflag [#allocation4], %s209
        %s211 = sand.u32 %s98, 1
        %s212 = smul.addr %s211, 2
        %s213 = scalar_lea.vmem [#allocation7], %s212
        %v214 = vld [vmem:[%s179] sm:$0x3]
        %v215 = vmul.f32 %v214, 5.656854
        %v216 = vld [vmem:[%s188] sm:$0x1]
        %v218 = vperm.slane %v216, 0
        %v220 = vadd.f32 %v215, %v218
        %221 = vst [vmem:[%s213] sm:$0x3] %v220
        %s222 = sand.u32 %s98, 1
        %s223 = scalar_lea.sflag [#allocation4], %s222
        %s224 = sand.u32 %s98, 1
        %s225 = smul.addr %s224, 2
        %s226 = scalar_lea.vmem [#allocation7], %s225
        // Predicated region
        $region37: #{tpu_custom_call.1} parent=27 // pred_check
          %p227 = pneg %p108
        $region38: #{tpu_custom_call.1} parent=27 // pred_check_branch
          %229 = sbr.rel (%p227) target = $region40
        $region39: #{tpu_custom_call.1} parent=27 // pred_region
          %231 = vsyncadd %s223, 0
          %s232 = smul.addr %s27, 2
          %s233 = sadd.s32 %s26, %s232
          %s234 = smul.addr %s233, 2
          %s235 = scalar_lea.hbm %s2, %s234
          %s237 = sshll.u32 %s226, 4
          %s238 = int_to_ptr.vmem [resolvable:$true] %s237
          %s239 = sshll.u32 %s235, 4
          %s240 = int_to_ptr.hbm [resolvable:$true] %s239
          %242 = dma.vmem_to_hbm [thread:$0]  %s238, 32, %s240, %s223
        $region40: #{tpu_custom_call.1} parent=27 // pred_fallthru
          _
      $region28: #{tpu_custom_call.1} parent=5 // pred_fallthru
        _
      %p243 = scmp.le.s32.totalorder 2, %s17
      // Predicated region
      $region41: #{tpu_custom_call.1} parent=5 // pred_check
        %p244 = pneg %p243
      $region42: #{tpu_custom_call.1} parent=5 // pred_check_branch
        %246 = sbr.rel (%p244) target = $region44
      $region43: #{tpu_custom_call.1} parent=5 // pred_region
        %s247 = ssub.s32 %s17, 2
        // Predicated region
        $region45: #{tpu_custom_call.1} parent=43 // pred_check
          %p248 = pneg %p114
        $region46: #{tpu_custom_call.1} parent=43 // pred_check_branch
          %250 = sbr.rel (%p248) target = $region48
        $region47: #{tpu_custom_call.1} parent=43 // pred_region
          %s251 = sand.u32 %s99, 1
          %s252 = scalar_lea.sflag [#allocation4], %s251
          %s253 = sand.u32 %s99, 1
          %s254 = smul.addr %s253, 2
          %s255 = scalar_lea.vmem [#allocation7], %s254
          %257 = dma.done %s252, 32
        $region48: #{tpu_custom_call.1} parent=43 // pred_fallthru
          _
      $region44: #{tpu_custom_call.1} parent=5 // pred_fallthru
        _
    $region6: #{tpu_custom_call.1} parent=1 // loop_footer
      %s21 = sadd.s32 1, %s17
    $region7: #{tpu_custom_call.1} parent=1 // loop_footer_branch
      %16 = sbr.rel target = $region3
    $region8: #{tpu_custom_call.1} parent=1 // loop_exit
      _
    %258 = vsyncpa [#allocation3], 1
    %s259 = scalar_lea.sflag [#allocation3], 1
    %260 = vsyncpa %s259, 1
    %261 = vsyncpa [#allocation6], 1
    %s262 = scalar_lea.sflag [#allocation6], 1
    %263 = vsyncpa %s262, 1
    %264 = vsyncpa [#allocation4], 1
    %s265 = scalar_lea.sflag [#allocation4], 1
    %266 = vsyncpa %s265, 1

</llo_original>
